<compile_context>
chip_gen: v6e
topology: v6e:2x2x1
jax: 0.10.0
libtpu: 0.0.40
codegen_flags: <defaults>
</compile_context>

<pallas_src>
import warnings

import numpy as np

import jax
import jax.numpy as jnp
from jax.experimental import pallas as pl
from jax.experimental.pallas import tpu as pltpu


# --------------------------------------------------------------------------
# Kernels
# --------------------------------------------------------------------------
def _identity_alias_kernel(x_hbm_ref, o_hbm_ref):
    # The output HBM buffer is aliased to the (donated) input buffer via
    # input_output_aliases={0: 0}: the bytes are already where they need to
    # be, so no data movement is issued at all (~0 bytes of HBM traffic).
    del x_hbm_ref, o_hbm_ref


def _identity_copy_kernel(x_hbm_ref, o_hbm_ref, copy_sem):
    # One whole-array HBM->HBM DMA: no VMEM round trip, no vld/vst copy work,
    # no per-grid-step pipeline overhead; the DMA engine streams at the HBM
    # roofline on all generations and is shape-agnostic (ragged shapes OK).
    copy = pltpu.make_async_copy(x_hbm_ref, o_hbm_ref, copy_sem)
    copy.start()
    copy.wait()


# --------------------------------------------------------------------------
# Wrappers
# --------------------------------------------------------------------------
def _identity_alias_impl(x):
    if x.size == 0:
        # Degenerate case: nothing to alias/copy; Identity is just x.
        return x
    return pl.pallas_call(
        _identity_alias_kernel,
        out_shape=jax.ShapeDtypeStruct(x.shape, x.dtype),
        in_specs=[pl.BlockSpec(memory_space=pl.ANY)],
        out_specs=pl.BlockSpec(memory_space=pl.ANY),
        input_output_aliases={0: 0},
    )(x)


# Donating the argument lets XLA truly alias the input HBM buffer to the
# output (no defensive copy is inserted before the pallas_call).
identity_forward = jax.jit(_identity_alias_impl, donate_argnums=0)


@jax.jit
def identity_copy(x):
    """Identity that materializes a distinct output buffer (non-donating)."""
    if x.size == 0:
        return x
    return pl.pallas_call(
        _identity_copy_kernel,
        out_shape=jax.ShapeDtypeStruct(x.shape, x.dtype),
        in_specs=[pl.BlockSpec(memory_space=pl.ANY)],
        out_specs=pl.BlockSpec(memory_space=pl.ANY),
        scratch_shapes=[pltpu.SemaphoreType.DMA],
    )(x)


# --------------------------------------------------------------------------
# Self-test
# --------------------------------------------------------------------------
if __name__ == "__main__":
    warnings.filterwarnings(
        "ignore", message="Some donated buffers were not usable")

    # Small deterministic input consistent with the Identity module.
    x = jax.random.normal(jax.random.PRNGKey(0), (2, 4, 16, 16), jnp.float32)

    # Snapshot to host *before* calling: the primary path donates x's buffer.
    x_host = np.asarray(jax.device_get(x))

    out = identity_forward(x)
    jax.block_until_ready(out)
    assert out.shape == x_host.shape
    assert out.dtype == x_host.dtype
    assert np.array_equal(np.asarray(jax.device_get(out)), x_host)

    # Non-donating HBM->HBM DMA copy variant, including a ragged
    # (non-multiple-of-128) shape the old lane-reshape fallback mishandled.
    y = jax.random.normal(jax.random.PRNGKey(1), (2048, 250), jnp.float32)
    out_copy = identity_copy(y)
    jax.block_until_ready(out_copy)
    assert out_copy.shape == y.shape
    assert out_copy.dtype == y.dtype
    assert bool(jnp.array_equal(out_copy, y))

    print("KERNEL_OK")
</pallas_src>

<mosaic_0001>
module attributes {stable_mosaic.version = 11 : i64} {
  func.func @_identity_alias_kernel(%arg0: memref<2x4x16x16xf32, #tpu.memory_space<any>>, %arg1: memref<2x4x16x16xf32, #tpu.memory_space<any>>) attributes {dimension_semantics = [], scalar_prefetch = 0 : i64, scratch_operands = 0 : i64, tpu.core_type = #tpu.core_type<tc>} {
    return
  }
}

</mosaic_0001>

<llo_original>
// kernel: _identity_alias_impl.1
$region0: #{_identity_alias_impl.1}
  #allocation0 [shape = 'u32[]', space=smem, size = 0x4, offset = 0x4, fixed_abs, tag = 'smem constant byte address 0x4 - core index']
  #allocation1 [shape = 'u32[144,128]{1,0:T(1,128)}', space=vmem, size = 0x12000, scoped, tag = 'internal scratch']
  %s0 = inlined_call_operand.hbm [shape: f32[2,4,16,16], index: 0, kind: input, shape index: {}, may-alias: {0,1}]
  %s1 = inlined_call_operand.hbm [shape: f32[2,4,16,16], index: 1, kind: output, shape index: {}, may-alias: {0,1}]
  %s2 = sld [smem:[#allocation0]]
  $region2: #{_identity_alias_impl.1} parent=0
    _
  %s4 = ssub.s32 1, %s2
  %s5 = scalar_select 0, %s4, %s2

</llo_original>
